<compile_context>
chip_gen: v6e
topology: v6e:2x2x1
jax: 0.10.0
libtpu: 0.0.40
codegen_flags: <defaults>
</compile_context>

<pallas_src>
import functools

import jax
import jax.numpy as jnp
from jax.experimental import pallas as pl
from jax.experimental.pallas import tpu as pltpu


def _round_up(x: int, m: int) -> int:
    return ((x + m - 1) // m) * m


def _pick_tile(total: int, candidates) -> int:
    """Largest candidate evenly dividing `total` (total is a multiple of 128)."""
    for c in candidates:
        if total % c == 0:
            return c
    return 128


# -----------------------------------------------------------------------------
# Kernels
# -----------------------------------------------------------------------------
def _small_kernel(x_ref, w_ref, b_ref, o_ref, *, n_out, apply_relu):
    """Whole problem in one VMEM block (grid=()).  x:(B,Kp) w:(Kp,Np) b:(1,Np)."""
    acc = jnp.dot(x_ref[...].astype(w_ref.dtype), w_ref[...],
                  preferred_element_type=jnp.float32)
    acc = acc + b_ref[...]
    if apply_relu:
        acc = jnp.maximum(acc, 0.0)
    o_ref[...] = acc[:, :n_out].astype(o_ref.dtype)


def _tiled_kernel(x_ref, w_ref, b_ref, o_ref, *, apply_relu):
    """One (tm, tn) output tile, accumulated in place over the K grid axis."""
    k = pl.program_id(2)

    @pl.when(k == 0)
    def _init():
        # Seed the resident output block with the bias -> no separate add later.
        o_ref[...] = jnp.broadcast_to(b_ref[...], o_ref.shape).astype(o_ref.dtype)

    # MXU matmul, f32 accumulation directly into the (f32) output block; its
    # block index is constant across k so it stays resident in VMEM.
    o_ref[...] += jnp.dot(x_ref[...].astype(w_ref.dtype), w_ref[...],
                          preferred_element_type=jnp.float32)

    if apply_relu:
        @pl.when(k == pl.num_programs(2) - 1)
        def _finalize():
            o_ref[...] = jnp.maximum(o_ref[...], 0.0)


# -----------------------------------------------------------------------------
# Wrappers
# -----------------------------------------------------------------------------
def prepare_params(weight, bias, *, op_dtype=jnp.bfloat16):
    """One-time weight/bias preparation.  Cache the result across forward calls.

    weight: (output_size, input_size)  -- torch.nn.Linear convention
    bias:   (output_size,)
    """
    n_out, k_in = weight.shape
    assert bias.shape == (n_out,)
    kp = _round_up(k_in, 128)
    np_ = _round_up(n_out, 128)
    w = jnp.zeros((kp, np_), op_dtype).at[:k_in, :n_out].set(
        weight.T.astype(op_dtype))
    b = jnp.zeros((1, np_), jnp.float32).at[0, :n_out].set(
        bias.astype(jnp.float32))
    return {"w": w, "b": b, "input_size": int(k_in), "output_size": int(n_out)}


_SMALL_PATH_BYTES = 4 * 1024 * 1024  # single-block fast-path VMEM budget


def hidden_layer_prepared(x, params, *, relu=True):
    """Hot path: relu(x @ W.T + b) using a pre-prepared weight (prepare_params)."""
    w, b = params["w"], params["b"]
    k_in, n_out = params["input_size"], params["output_size"]
    kp, np_ = w.shape

    orig_shape = x.shape
    x2 = x.reshape(-1, orig_shape[-1])
    bsz, k = x2.shape
    assert k == k_in, (k, k_in)

    x_bytes = jnp.dtype(x2.dtype).itemsize
    w_bytes = jnp.dtype(w.dtype).itemsize

    small_footprint = (bsz * kp * x_bytes + kp * np_ * w_bytes
                       + np_ * 4 + bsz * np_ * 4)
    if bsz <= 1024 and small_footprint <= _SMALL_PATH_BYTES:
        # ----------------- tiny-problem fast path: single block, no grid -----
        if k != kp:
            xk = jnp.zeros((bsz, kp), x2.dtype).at[:, :k].set(x2)
        else:
            xk = x2
        out = pl.pallas_call(
            functools.partial(_small_kernel, n_out=n_out, apply_relu=relu),
            out_shape=jax.ShapeDtypeStruct((bsz, n_out), jnp.float32),
        )(xk, w, b)
    else:
        # ----------------- tiled M/N/K grid path ------------------------------
        row_align = 16 if w_bytes == 2 else 8
        if bsz <= 512:
            tm = _round_up(bsz, row_align)
            mp = tm
        else:
            tm = min((256, 192, 128), key=lambda t: (_round_up(bsz, t) - bsz, -t))
            mp = _round_up(bsz, tm)
        tk = _pick_tile(kp, (1024, 512, 256, 128))
        tn = _pick_tile(np_, (512, 256, 128))

        # v7x megacore: make sure some parallel axis has >= 2 blocks if possible.
        if mp // tm == 1 and np_ // tn == 1 and np_ % 256 == 0:
            tn = np_ // 2

        if (mp, kp) != (bsz, k):
            xp = jnp.zeros((mp, kp), x2.dtype).at[:bsz, :k].set(x2)
        else:
            xp = x2

        gm, gn, gk = mp // tm, np_ // tn, kp // tk

        # ~2x the double-buffered live tile set, clamped so it is legal on v7x
        # (64 MiB VMEM/TC) and leaves headroom on v5e/v6e (128 MiB VMEM).
        tile_bytes = (2 * tm * tk * x_bytes + 2 * tk * tn * w_bytes
                      + 2 * tm * tn * 4 + 2 * tn * 4)
        vmem_limit = int(min(64 * 1024 * 1024,
                             max(16 * 1024 * 1024, 2 * tile_bytes)))

        cost = pl.CostEstimate(
            flops=2 * mp * kp * np_,
            transcendentals=0,
            # x is re-read once per N tile, w once per M tile.
            bytes_accessed=int(mp * kp * x_bytes * gn + kp * np_ * w_bytes * gm
                               + mp * np_ * 4 + np_ * 4 * gm * gn),
        )

        out_padded = pl.pallas_call(
            functools.partial(_tiled_kernel, apply_relu=relu),
            out_shape=jax.ShapeDtypeStruct((mp, np_), jnp.float32),
            grid=(gm, gn, gk),
            in_specs=[
                pl.BlockSpec((tm, tk), lambda i, j, kk: (i, kk)),   # x tile
                pl.BlockSpec((tk, tn), lambda i, j, kk: (kk, j)),   # w tile
                pl.BlockSpec((1, tn), lambda i, j, kk: (0, j)),     # bias tile
            ],
            out_specs=pl.BlockSpec((tm, tn), lambda i, j, kk: (i, j)),
            compiler_params=pltpu.CompilerParams(
                dimension_semantics=("parallel", "parallel", "arbitrary"),
                vmem_limit_bytes=vmem_limit,
            ),
            cost_estimate=cost,
        )(xp, w, b)
        out = out_padded[:bsz, :n_out]

    return out.reshape(orig_shape[:-1] + (n_out,))


def hidden_layer(x, weight, bias, *, relu=True, op_dtype=jnp.bfloat16):
    """PyTorch-convention one-shot entry point (prepares the weight per call).

    For repeated forward passes, call prepare_params() ONCE and use
    hidden_layer_prepared() on the hot path.
    """
    return hidden_layer_prepared(
        x, prepare_params(weight, bias, op_dtype=op_dtype), relu=relu)


# -----------------------------------------------------------------------------
# Demo / self-test
# -----------------------------------------------------------------------------
if __name__ == "__main__":
    key = jax.random.PRNGKey(0)
    k_small, k_large = jax.random.split(key)

    # ------------------------------- small shapes (the module's typical use) --
    batch, input_size, output_size = 8, 32, 16
    kx, kw, kb = jax.random.split(k_small, 3)
    bound = 1.0 / jnp.sqrt(jnp.float32(input_size))
    weight = jax.random.uniform(kw, (output_size, input_size), jnp.float32,
                                minval=-bound, maxval=bound)
    bias = jax.random.uniform(kb, (output_size,), jnp.float32,
                              minval=-bound, maxval=bound)
    x = jax.random.normal(kx, (batch, input_size), dtype=jnp.float32)

    ref = jnp.maximum(
        jnp.matmul(x, weight.T, precision=jax.lax.Precision.HIGHEST) + bias, 0.0)

    # f32-weight path (exact-ish) -- exercises the single-block fast path.
    params_f32 = prepare_params(weight, bias, op_dtype=jnp.float32)
    out_f32 = jax.block_until_ready(hidden_layer_prepared(x, params_f32))
    assert out_f32.shape == (batch, output_size)
    assert jnp.allclose(out_f32, ref, atol=1e-5, rtol=1e-5)

    # bf16-weight path (default, weight-bandwidth friendly), looser tolerance.
    params_bf16 = prepare_params(weight, bias)           # prepared once, cached
    out_bf16 = jax.block_until_ready(hidden_layer_prepared(x, params_bf16))
    assert out_bf16.shape == (batch, output_size)
    assert jnp.allclose(out_bf16, ref, atol=2e-2, rtol=2e-2)

    # relu=False variant (pure Linear).
    out_lin = jax.block_until_ready(
        hidden_layer_prepared(x, params_f32, relu=False))
    ref_lin = jnp.matmul(x, weight.T, precision=jax.lax.Precision.HIGHEST) + bias
    assert jnp.allclose(out_lin, ref_lin, atol=1e-5, rtol=1e-5)

    # One-shot PyTorch-convention wrapper.
    out_once = jax.block_until_ready(hidden_layer(x, weight, bias))
    assert jnp.allclose(out_once, ref, atol=2e-2, rtol=2e-2)

    # ------------------------------- larger shape: tiled M/N/K grid path ------
    b_l, k_l, n_l = 640, 2048, 384
    kx2, kw2, kb2 = jax.random.split(k_large, 3)
    bound_l = 1.0 / jnp.sqrt(jnp.float32(k_l))
    weight_l = jax.random.uniform(kw2, (n_l, k_l), jnp.float32,
                                  minval=-bound_l, maxval=bound_l)
    bias_l = jax.random.uniform(kb2, (n_l,), jnp.float32,
                                minval=-bound_l, maxval=bound_l)
    x_l = jax.random.normal(kx2, (b_l, k_l), dtype=jnp.float32)
    ref_l = jnp.maximum(
        jnp.matmul(x_l, weight_l.T, precision=jax.lax.Precision.HIGHEST) + bias_l,
        0.0)

    params_l_bf16 = prepare_params(weight_l, bias_l)     # bf16 weight (default)
    out_l = jax.block_until_ready(hidden_layer_prepared(x_l, params_l_bf16))
    assert out_l.shape == (b_l, n_l)
    assert jnp.allclose(out_l, ref_l, atol=5e-2, rtol=5e-2)

    params_l_f32 = prepare_params(weight_l, bias_l, op_dtype=jnp.float32)
    out_l32 = jax.block_until_ready(hidden_layer_prepared(x_l, params_l_f32))
    assert jnp.allclose(out_l32, ref_l, atol=1e-3, rtol=1e-3)

    print("KERNEL_OK")
</pallas_src>

<mosaic_0001>
module attributes {stable_mosaic.version = 11 : i64} {
  func.func @_small_kernel(%arg0: memref<8x128xf32, #tpu.memory_space<vmem>>, %arg1: memref<128x128xf32, #tpu.memory_space<vmem>>, %arg2: memref<1x128xf32, #tpu.memory_space<vmem>>, %arg3: memref<8x16xf32, #tpu.memory_space<vmem>>) attributes {dimension_semantics = [], scalar_prefetch = 0 : i64, scratch_operands = 0 : i64, tpu.core_type = #tpu.core_type<tc>} {
    %c0 = arith.constant 0 : index
    %c0_0 = arith.constant 0 : index
    %0 = vector.load %arg0[%c0, %c0_0] : memref<8x128xf32, #tpu.memory_space<vmem>>, vector<8x128xf32>
    %c0_1 = arith.constant 0 : index
    %c0_2 = arith.constant 0 : index
    %1 = vector.load %arg1[%c0_1, %c0_2] : memref<128x128xf32, #tpu.memory_space<vmem>>, vector<128x128xf32>
    %cst = arith.constant dense<0.000000e+00> : vector<8x128xf32>
    %2 = tpu.matmul %0, %1, %cst {dimension_numbers = #tpu.dot_dimension_numbers<[1], [0], [0], [1], [0, 0, 1, 1], [], []>} : vector<8x128xf32>, vector<128x128xf32>, vector<8x128xf32> -> vector<8x128xf32>
    %c0_3 = arith.constant 0 : index
    %c0_4 = arith.constant 0 : index
    %3 = vector.load %arg2[%c0_3, %c0_4] : memref<1x128xf32, #tpu.memory_space<vmem>>, vector<1x128xf32>
    %4 = vector.broadcast %3 : vector<1x128xf32> to vector<8x128xf32>
    %5 = arith.addf %2, %4 : vector<8x128xf32>
    %cst_5 = arith.constant 0.000000e+00 : f32
    %6 = vector.broadcast %cst_5 : f32 to vector<8x128xf32>
    %7 = arith.maximumf %5, %6 : vector<8x128xf32>
    %8 = vector.extract_strided_slice %7 {offsets = [0, 0], sizes = [8, 16], strides = [1, 1]} : vector<8x128xf32> to vector<8x16xf32>
    %c0_6 = arith.constant 0 : index
    %c0_7 = arith.constant 0 : index
    %9 = vector.load %arg3[%c0_6, %c0_7] : memref<8x16xf32, #tpu.memory_space<vmem>>, vector<8x16xf32>
    tpu.vector_store %arg3[%c0_6, %c0_7], %8 {strides = array<i32>} : memref<8x16xf32, #tpu.memory_space<vmem>>, vector<8x16xf32>,
    return
  }
}

</mosaic_0001>

<llo_original>
// kernel: tpu_custom_call.1
$region0: #{tpu_custom_call.1}
  #allocation0 [shape = 'u32[]', space=smem, size = 0x4, offset = 0x4, fixed_abs, tag = 'smem constant byte address 0x4 - core index']
  #allocation1 [shape = 'u32[144,128]{1,0:T(1,128)}', space=vmem, size = 0x12000, scoped, tag = 'internal scratch']
  %s0 = inlined_call_operand.hbm [shape: f32[8,128], index: 0, kind: input, shape index: {}]
  %s1 = inlined_call_operand.hbm [shape: f32[128,128], index: 1, kind: input, shape index: {}]
  %s2 = inlined_call_operand.vmem [shape: f32[1,128], index: 2, kind: input, shape index: {}]
  %s3 = inlined_call_operand.hbm [shape: f32[8,16], index: 3, kind: output, shape index: {}]
  %s4 = sld [smem:[#allocation0]]
  $region30: #{tpu_custom_call.1} parent=0
    _
  %s6 = ssub.s32 1, %s4
  %s7 = scalar_select 0, %s6, %s4
  $region1: #{tpu_custom_call.1} parent=0
    #allocation2 [shape = 'u8[4096]{0}', space=vmem, size = 0x1000, scoped, tag = 'input window, operand 0, single buffered']
    #allocation3 [shape = 's32[1]{0}', space=sflag, size = 0x4, scoped, tag = 'scoped memory for tpu_custom_call.1']
    #allocation4 [shape = 's32[1]{0}', space=sflag, size = 0x4, scoped, tag = 'scoped memory for tpu_custom_call.1']
    #allocation5 [shape = 'u8[65536]{0}', space=vmem, size = 0x10000, scoped, tag = 'input window, operand 1, single buffered']
    #allocation6 [shape = 's32[1]{0}', space=sflag, size = 0x4, scoped, tag = 'scoped memory for tpu_custom_call.1']
    #allocation7 [shape = 'u8[4096]{0}', space=vmem, size = 0x1000, scoped, tag = 'output window, operand 0, single buffered']
    %8 = vsyncpa [#allocation3], 0
    %9 = vsyncpa [#allocation6], 0
    %10 = vsyncpa [#allocation4], 0
    // Predicated region
    $region2: #{tpu_custom_call.1} parent=1 // pred_check
      _
    $region3: #{tpu_custom_call.1} parent=1 // pred_check_branch
      %12 = sbr.rel (0) target = $region5
    $region4: #{tpu_custom_call.1} parent=1 // pred_region
      %s14 = ssub.s32 128, 128
      %15 = vsyncadd [#allocation3], %s14
      %s17 = sshll.u32 [#allocation2], 4
      %s18 = int_to_ptr.vmem [resolvable:$true] %s17
      %20 = dma.hbm_to_vmem [thread:$0]  %s0, 128, %s18, [#allocation3]
    $region5: #{tpu_custom_call.1} parent=1 // pred_fallthru
      _
    // Predicated region
    $region6: #{tpu_custom_call.1} parent=1 // pred_check
      _
    $region7: #{tpu_custom_call.1} parent=1 // pred_check_branch
      %22 = sbr.rel (0) target = $region9
    $region8: #{tpu_custom_call.1} parent=1 // pred_region
      %s24 = ssub.s32 2048, 2048
      %25 = vsyncadd [#allocation6], %s24
      %s26 = sshll.u32 [#allocation5], 4
      %s27 = int_to_ptr.vmem [resolvable:$true] %s26
      %32 = dma.hbm_to_vmem [thread:$0]  %s1, 2048, %s27, [#allocation6], 128, 128, 8
    $region9: #{tpu_custom_call.1} parent=1 // pred_fallthru
      _
    // Predicated region
    $region10: #{tpu_custom_call.1} parent=1 // pred_check
      _
    $region11: #{tpu_custom_call.1} parent=1 // pred_check_branch
      %34 = sbr.rel (0) target = $region13
    $region12: #{tpu_custom_call.1} parent=1 // pred_region
      _
    $region13: #{tpu_custom_call.1} parent=1 // pred_fallthru
      _
    // Predicated region
    $region14: #{tpu_custom_call.1} parent=1 // pred_check
      _
    $region15: #{tpu_custom_call.1} parent=1 // pred_check_branch
      %36 = sbr.rel (0) target = $region17
    $region16: #{tpu_custom_call.1} parent=1 // pred_region
      %37 = dma.done [#allocation3], 128
    $region17: #{tpu_custom_call.1} parent=1 // pred_fallthru
      _
    // Predicated region
    $region18: #{tpu_custom_call.1} parent=1 // pred_check
      _
    $region19: #{tpu_custom_call.1} parent=1 // pred_check_branch
      %39 = sbr.rel (0) target = $region21
    $region20: #{tpu_custom_call.1} parent=1 // pred_region
      %40 = dma.done [#allocation6], 2048
    $region21: #{tpu_custom_call.1} parent=1 // pred_fallthru
      _
    %v41 = vld [vmem:[#allocation2] sm:$0xff]
    %v42 = vld [vmem:[#allocation5] sm:$0xff]
    %v43 = vld [vmem:[#allocation5 + $0x8] sm:$0xff]
    %v44 = vld [vmem:[#allocation5 + $0x10] sm:$0xff]
    %v45 = vld [vmem:[#allocation5 + $0x18] sm:$0xff]
    %v46 = vld [vmem:[#allocation5 + $0x20] sm:$0xff]
    %v47 = vld [vmem:[#allocation5 + $0x28] sm:$0xff]
    %v48 = vld [vmem:[#allocation5 + $0x30] sm:$0xff]
    %v49 = vld [vmem:[#allocation5 + $0x38] sm:$0xff]
    %v50 = vld [vmem:[#allocation5 + $0x40] sm:$0xff]
    %v51 = vld [vmem:[#allocation5 + $0x48] sm:$0xff]
    %v52 = vld [vmem:[#allocation5 + $0x50] sm:$0xff]
    %v53 = vld [vmem:[#allocation5 + $0x58] sm:$0xff]
    %v54 = vld [vmem:[#allocation5 + $0x60] sm:$0xff]
    %v55 = vld [vmem:[#allocation5 + $0x68] sm:$0xff]
    %v56 = vld [vmem:[#allocation5 + $0x70] sm:$0xff]
    %v57 = vld [vmem:[#allocation5 + $0x78] sm:$0xff]
    %v58 = vld [vmem:[%s2] sm:$0x1]
    %v60 = vlaneseq
    %v61 = vshrl.u32 %v60, 7
    %v62 = vsub.s32 0, %v61
    %v63 = vrot.slane %v58, %v62
    %65 = vmatprep.subr.mxu0 0.0
    %66 = vmatpush1.msra.mxu0 %v57
    %67 = vmatprep.subr.mxu0 0.0
    %68 = vmatpush1.msra.mxu0 %v56
    %69 = vmatprep.subr.mxu0 0.0
    %70 = vmatpush1.msra.mxu0 %v55
    %71 = vmatprep.subr.mxu0 0.0
    %72 = vmatpush1.msra.mxu0 %v54
    %73 = vmatprep.subr.mxu0 0.0
    %74 = vmatpush1.msra.mxu0 %v53
    %75 = vmatprep.subr.mxu0 0.0
    %76 = vmatpush1.msra.mxu0 %v52
    %77 = vmatprep.subr.mxu0 0.0
    %78 = vmatpush1.msra.mxu0 %v51
    %79 = vmatprep.subr.mxu0 0.0
    %80 = vmatpush1.msra.mxu0 %v50
    %81 = vmatprep.subr.mxu0 0.0
    %82 = vmatpush1.msra.mxu0 %v49
    %83 = vmatprep.subr.mxu0 0.0
    %84 = vmatpush1.msra.mxu0 %v48
    %85 = vmatprep.subr.mxu0 0.0
    %86 = vmatpush1.msra.mxu0 %v47
    %87 = vmatprep.subr.mxu0 0.0
    %88 = vmatpush1.msra.mxu0 %v46
    %89 = vmatprep.subr.mxu0 0.0
    %90 = vmatpush1.msra.mxu0 %v45
    %91 = vmatprep.subr.mxu0 0.0
    %92 = vmatpush1.msra.mxu0 %v44
    %93 = vmatprep.subr.mxu0 0.0
    %94 = vmatpush1.msra.mxu0 %v43
    %95 = vmatprep.subr.mxu0 0.0
    %96 = vmatpush1.msra.mxu0 %v42
    %97 = vmatprep.subr.mxu0 0.0
    %98 = vmatpush2.msra.mxu0 0.0
    %99 = vmatprep.subr.mxu0 0.0
    %100 = vmatpush2.msra.mxu0 0.0
    %101 = vmatprep.subr.mxu0 0.0
    %102 = vmatpush2.msra.mxu0 0.0
    %103 = vmatprep.subr.mxu0 0.0
    %104 = vmatpush2.msra.mxu0 0.0
    %105 = vmatprep.subr.mxu0 0.0
    %106 = vmatpush2.msra.mxu0 0.0
    %107 = vmatprep.subr.mxu0 0.0
    %108 = vmatpush2.msra.mxu0 0.0
    %109 = vmatprep.subr.mxu0 0.0
    %110 = vmatpush2.msra.mxu0 0.0
    %111 = vmatprep.subr.mxu0 0.0
    %112 = vmatpush2.msra.mxu0 0.0
    %113 = vmatprep.subr.mxu0 0.0
    %114 = vmatpush2.msra.mxu0 0.0
    %115 = vmatprep.subr.mxu0 0.0
    %116 = vmatpush2.msra.mxu0 0.0
    %117 = vmatprep.subr.mxu0 0.0
    %118 = vmatpush2.msra.mxu0 0.0
    %119 = vmatprep.subr.mxu0 0.0
    %120 = vmatpush2.msra.mxu0 0.0
    %121 = vmatprep.subr.mxu0 0.0
    %122 = vmatpush2.msra.mxu0 0.0
    %123 = vmatprep.subr.mxu0 0.0
    %124 = vmatpush2.msra.mxu0 0.0
    %125 = vmatprep.subr.mxu0 0.0
    %126 = vmatpush2.msra.mxu0 0.0
    %127 = vmatprep.subr.mxu0 0.0
    %128 = vmatpush2.msra.mxu0 0.0
    %129 = vmatprep.mubr.f32.mxu0 0.0
    %130 = vmatmul.mubr.f32.gmra.mxu0 %v41
    %v131 = vpop.f32.mrf.mxu0
    %v132 = vadd.f32 %v63, %v131
    %v133 = vpop.f32.mrf.mxu0
    %134 = vdwg.mxu0
    %v135 = vmax.f32 %v132, 0.0
    %vm136 = vcmask 130048
    %137 = vst.msk [vmem:[#allocation7] sm:$0xff] %vm136, %v135
    // Predicated region
    $region22: #{tpu_custom_call.1} parent=1 // pred_check
      _
    $region23: #{tpu_custom_call.1} parent=1 // pred_check_branch
      %139 = sbr.rel (0) target = $region25
    $region24: #{tpu_custom_call.1} parent=1 // pred_region
      %s141 = ssub.s32 128, 128
      %142 = vsyncadd [#allocation4], %s141
      %s144 = sshll.u32 [#allocation7], 4
      %s145 = int_to_ptr.vmem [resolvable:$true] %s144
      %147 = dma.vmem_to_hbm [thread:$0]  %s145, 128, %s3, [#allocation4]
    $region25: #{tpu_custom_call.1} parent=1 // pred_fallthru
      _
    // Predicated region
    $region26: #{tpu_custom_call.1} parent=1 // pred_check
      _
    $region27: #{tpu_custom_call.1} parent=1 // pred_check_branch
      %149 = sbr.rel (0) target = $region29
    $region28: #{tpu_custom_call.1} parent=1 // pred_region
      %150 = dma.done [#allocation4], 128
    $region29: #{tpu_custom_call.1} parent=1 // pred_fallthru
      _
    %151 = vsyncpa [#allocation3], 1
    %152 = vsyncpa [#allocation6], 1
    %153 = vsyncpa [#allocation4], 1

</llo_original>
